<compile_context>
chip_gen: v6e
topology: v6e:2x2x1
jax: 0.10.0
libtpu: 0.0.40
codegen_flags: <defaults>
</compile_context>

<pallas_src>
import functools

import jax
import jax.numpy as jnp
from jax.experimental import pallas as pl
from jax.experimental.pallas import tpu as pltpu


def _round_up(n, m):
    return ((n + m - 1) // m) * m


def _cdiv(a, b):
    return -(-a // b)


def _mlp_kernel(x_ref, b_ref, *rest, out_widths):
    """Fused MLP over one batch tile.

    x_ref:  (TM, K0)            activations for this batch tile (already in MXU dtype)
    b_ref:  (L, F_max)          all biases, zero-padded, stacked, f32
    rest:   w0_ref..w{L-1}_ref  (K_i, N_pad_i) resident weights (already in MXU dtype),
            then o_ref (TM, N_pad_last)
    """
    num_layers = len(out_widths)
    w_refs = rest[:num_layers]
    o_ref = rest[num_layers]

    h = x_ref[...]  # already in the MXU compute dtype (f32 or bf16); no extra cast
    for i in range(num_layers):
        w = w_refs[i][...]
        # MXU matmul with f32 accumulation.
        acc = jnp.dot(h, w, preferred_element_type=jnp.float32)
        # f32 epilogue on the VPU (bias + ReLU) -- exact padding: padded cols stay 0.
        acc = acc + b_ref[i : i + 1, : out_widths[i]]
        if i < num_layers - 1:
            # Single cast back to the MXU dtype for the next layer's matmul.
            h = jnp.maximum(acc, 0.0).astype(w.dtype)
        else:
            o_ref[...] = acc.astype(o_ref.dtype)


def prepare_advanced_net_params(params, *, mxu_dtype=None):
    """One-time padding (and optional bf16 pre-cast) of AdvancedNet parameters.

    params: list of (W (in, out), b (out,)) per Linear layer (PyTorch weight transposed).
    mxu_dtype: None (f32 end-to-end) or jnp.bfloat16 (recommended on v5e/v6e/v7x;
               f32 accumulation + f32 epilogue are kept).
    """
    num_layers = len(params)
    d_in = params[0][0].shape[0]
    outs = [w.shape[1] for w, _ in params]
    out_pads = [_round_up(n, 128) for n in outs]           # lane-dense feature widths
    k_pads = [d_in] + out_pads[:-1]                        # layer-0 K stays unpadded
    f_max = max(out_pads)
    w_dtype = mxu_dtype if mxu_dtype is not None else params[0][0].dtype

    w_list = []
    b_stack = jnp.zeros((num_layers, f_max), jnp.float32)
    for i, (w, b) in enumerate(params):
        kp, np_ = k_pads[i], out_pads[i]
        wp = jnp.zeros((kp, np_), w_dtype).at[: w.shape[0], : w.shape[1]].set(w.astype(w_dtype))
        w_list.append(wp)
        b_stack = b_stack.at[i, : b.shape[0]].set(b.astype(jnp.float32))

    meta = dict(
        d_in=d_in,
        num_classes=outs[-1],
        out_pads=tuple(out_pads),
        k_pads=tuple(k_pads),
        f_max=f_max,
        mxu_dtype=mxu_dtype,
    )
    return dict(weights=tuple(w_list), biases=b_stack, meta=meta)


def advanced_net_forward(x, prepared, *, batch_tile=512):
    """Forward pass of AdvancedNet (dropout=0.0 -> no dropout layers).

    x: (B, input_size); prepared: output of prepare_advanced_net_params.
    """
    meta = prepared["meta"]
    w_list = prepared["weights"]
    b_stack = prepared["biases"]
    B, d_in = x.shape
    assert d_in == meta["d_in"]
    num_layers = len(w_list)
    out_pads, k_pads, f_max = meta["out_pads"], meta["k_pads"], meta["f_max"]
    n_last = out_pads[-1]
    mxu_dtype = meta["mxu_dtype"]

    # Cast activations once in the wrapper (halves x DMA bytes on the bf16 path).
    x_c = x.astype(mxu_dtype) if mxu_dtype is not None else x

    # Batch tiling: minimize pad waste, and force >=2 grid points when B > 8 so the
    # "parallel" axis shards across both TensorCores on v7x (no-op on v5e/v6e).
    n_tiles = _cdiv(B, batch_tile)
    if n_tiles == 1 and B > 8:
        n_tiles = 2
    tm = _round_up(_cdiv(B, n_tiles), 8)

    kernel = functools.partial(_mlp_kernel, out_widths=out_pads)

    w_bytes = sum(int(w.size) * w.dtype.itemsize for w in w_list)
    flops = 2 * n_tiles * tm * sum(k * n for k, n in zip(k_pads, out_pads))
    bytes_accessed = (
        int(x_c.size) * x_c.dtype.itemsize
        + w_bytes
        + int(b_stack.size) * 4
        + B * n_last * x.dtype.itemsize
    )
    cost = pl.CostEstimate(flops=int(flops), transcendentals=0, bytes_accessed=int(bytes_accessed))

    def _call(single_buffer_resident):
        # Constant-index (resident) blocks never re-DMA, so a single buffer is enough;
        # this halves their VMEM footprint (important on v7x's 64 MiB VMEM).
        res_kw = dict(pipeline_mode=pl.Buffered(1)) if single_buffer_resident else {}

        in_specs = [
            pl.BlockSpec((tm, d_in), lambda i: (i, 0)),                       # batch tile of x
            pl.BlockSpec((num_layers, f_max), lambda i: (0, 0), **res_kw),    # all biases, resident
        ] + [
            pl.BlockSpec((k_pads[j], out_pads[j]), lambda i: (0, 0), **res_kw)  # resident weights
            for j in range(num_layers)
        ]
        out_specs = pl.BlockSpec((tm, n_last), lambda i: (i, 0))              # lane-dense output

        n_buf = 1 if single_buffer_resident else 2
        vmem_est = (
            2 * tm * (d_in * x_c.dtype.itemsize + n_last * 4)
            + n_buf * (w_bytes + int(b_stack.size) * 4)
        )
        cp_kwargs = dict(dimension_semantics=("parallel",))
        if vmem_est > 24 * 1024 * 1024:
            # TODO(synk): for hidden widths >~2048 on v7x (64 MiB VMEM) switch the resident
            # weights to an N-tiled or K-reduction ("arbitrary") grid axis instead of
            # whole-array residency.
            cp_kwargs["vmem_limit_bytes"] = min(int(vmem_est * 5 // 4), 64 * 1024 * 1024)

        return pl.pallas_call(
            kernel,
            out_shape=jax.ShapeDtypeStruct((B, n_last), x.dtype),
            grid=(n_tiles,),
            in_specs=in_specs,
            out_specs=out_specs,
            compiler_params=pltpu.CompilerParams(**cp_kwargs),
            cost_estimate=cost,
        )(x_c, b_stack, *w_list)

    try:
        out_pad = _call(True)
    except Exception:
        # Fallback for jax versions that reject pl.Buffered(1) on resident blocks.
        out_pad = _call(False)

    return out_pad[:, : meta["num_classes"]]


def init_advanced_net_params(key, input_size, hidden_sizes, num_classes, dtype=jnp.float32):
    """Deterministic parameter init mirroring nn.Linear shapes (stored transposed)."""
    sizes = [input_size] + list(hidden_sizes) + [num_classes]
    params = []
    for i in range(len(sizes) - 1):
        key, kw, kb = jax.random.split(key, 3)
        fan_in = sizes[i]
        bound = 1.0 / jnp.sqrt(fan_in)
        # PyTorch weight is (out, in); we store (in, out) so the kernel does x @ W.
        w = jax.random.uniform(kw, (sizes[i], sizes[i + 1]), dtype, -bound, bound)
        b = jax.random.uniform(kb, (sizes[i + 1],), dtype, -bound, bound)
        params.append((w, b))
    return params


def advanced_net_reference(x, params):
    n = len(params)
    for i, (w, b) in enumerate(params):
        x = x @ w + b
        if i < n - 1:
            x = jnp.maximum(x, 0.0)
    return x


if __name__ == "__main__":
    # Small shapes consistent with the module: input_size=32, hidden_sizes=[64, 32], num_classes=16.
    batch = 8
    input_size = 32
    hidden_sizes = [64, 32]
    num_classes = 16

    key = jax.random.PRNGKey(0)
    key, kx, kx2 = jax.random.split(key, 3)
    x = jax.random.normal(kx, (batch, input_size), jnp.float32)
    params = init_advanced_net_params(key, input_size, hidden_sizes, num_classes)

    ref = advanced_net_reference(x, params)

    # f32 path (default; exact).
    prepared_f32 = prepare_advanced_net_params(params)
    out = advanced_net_forward(x, prepared_f32)
    out = jax.block_until_ready(out)
    assert out.shape == (batch, num_classes)
    assert jnp.allclose(out, ref, atol=1e-5, rtol=1e-5)

    # Multi-tile path (>=2 grid points -> both v7x TensorCores busy), still exact f32.
    x2 = jax.random.normal(kx2, (32, input_size), jnp.float32)
    ref2 = advanced_net_reference(x2, params)
    out2 = jax.block_until_ready(advanced_net_forward(x2, prepared_f32))
    assert out2.shape == (32, num_classes)
    assert jnp.allclose(out2, ref2, atol=1e-5, rtol=1e-5)

    # bf16-MXU path (recommended on v5e/v6e/v7x): weights pre-cast in HBM, f32 accumulate
    # + f32 epilogue, looser tolerance.
    prepared_bf16 = prepare_advanced_net_params(params, mxu_dtype=jnp.bfloat16)
    out_bf16 = jax.block_until_ready(advanced_net_forward(x, prepared_bf16))
    assert out_bf16.shape == (batch, num_classes)
    assert jnp.allclose(out_bf16, ref, atol=5e-2, rtol=5e-2)

    print("KERNEL_OK")
</pallas_src>

<mosaic_0001>
module attributes {stable_mosaic.version = 11 : i64} {
  func.func @_mlp_kernel(%arg0: i32, %arg1: memref<8x32xf32, #tpu.memory_space<vmem>>, %arg2: memref<3x128xf32, #tpu.memory_space<vmem>>, %arg3: memref<32x128xf32, #tpu.memory_space<vmem>>, %arg4: memref<128x128xf32, #tpu.memory_space<vmem>>, %arg5: memref<128x128xf32, #tpu.memory_space<vmem>>, %arg6: memref<8x128xf32, #tpu.memory_space<vmem>>) attributes {dimension_semantics = [#tpu.dimension_semantics<parallel>], iteration_bounds = array<i64: 1>, scalar_prefetch = 0 : i64, scratch_operands = 0 : i64, tpu.core_type = #tpu.core_type<tc>, window_params = [{transform_indices = @transform_0, window_bounds = array<i64: 8, 32>}, {pipeline_mode = #tpu.pipeline_mode<synchronous>, transform_indices = @transform_1, window_bounds = array<i64: 3, 128>}, {pipeline_mode = #tpu.pipeline_mode<synchronous>, transform_indices = @transform_2, window_bounds = array<i64: 32, 128>}, {pipeline_mode = #tpu.pipeline_mode<synchronous>, transform_indices = @transform_3, window_bounds = array<i64: 128, 128>}, {pipeline_mode = #tpu.pipeline_mode<synchronous>, transform_indices = @transform_4, window_bounds = array<i64: 128, 128>}, {transform_indices = @transform_5, window_bounds = array<i64: 8, 128>}]} {
    %c0 = arith.constant 0 : index
    %c0_0 = arith.constant 0 : index
    %0 = vector.load %arg1[%c0, %c0_0] : memref<8x32xf32, #tpu.memory_space<vmem>>, vector<8x32xf32>
    %c0_1 = arith.constant 0 : index
    %c0_2 = arith.constant 0 : index
    %1 = vector.load %arg3[%c0_1, %c0_2] : memref<32x128xf32, #tpu.memory_space<vmem>>, vector<32x128xf32>
    %cst = arith.constant dense<0.000000e+00> : vector<8x128xf32>
    %2 = tpu.matmul %0, %1, %cst {dimension_numbers = #tpu.dot_dimension_numbers<[1], [0], [0], [1], [0, 0, 1, 1], [], []>} : vector<8x32xf32>, vector<32x128xf32>, vector<8x128xf32> -> vector<8x128xf32>
    %c0_3 = arith.constant 0 : index
    %c0_4 = arith.constant 0 : index
    %3 = vector.load %arg2[%c0_3, %c0_4] : memref<3x128xf32, #tpu.memory_space<vmem>>, vector<1x128xf32>
    %4 = vector.broadcast %3 : vector<1x128xf32> to vector<8x128xf32>
    %5 = arith.addf %2, %4 : vector<8x128xf32>
    %cst_5 = arith.constant 0.000000e+00 : f32
    %6 = vector.broadcast %cst_5 : f32 to vector<8x128xf32>
    %7 = arith.maximumf %5, %6 : vector<8x128xf32>
    %c0_6 = arith.constant 0 : index
    %c0_7 = arith.constant 0 : index
    %8 = vector.load %arg4[%c0_6, %c0_7] : memref<128x128xf32, #tpu.memory_space<vmem>>, vector<128x128xf32>
    %cst_8 = arith.constant dense<0.000000e+00> : vector<8x128xf32>
    %9 = tpu.matmul %7, %8, %cst_8 {dimension_numbers = #tpu.dot_dimension_numbers<[1], [0], [0], [1], [0, 0, 1, 1], [], []>} : vector<8x128xf32>, vector<128x128xf32>, vector<8x128xf32> -> vector<8x128xf32>
    %c1 = arith.constant 1 : index
    %c0_9 = arith.constant 0 : index
    %10 = vector.load %arg2[%c1, %c0_9] : memref<3x128xf32, #tpu.memory_space<vmem>>, vector<1x128xf32>
    %11 = vector.broadcast %10 : vector<1x128xf32> to vector<8x128xf32>
    %12 = arith.addf %9, %11 : vector<8x128xf32>
    %cst_10 = arith.constant 0.000000e+00 : f32
    %13 = vector.broadcast %cst_10 : f32 to vector<8x128xf32>
    %14 = arith.maximumf %12, %13 : vector<8x128xf32>
    %c0_11 = arith.constant 0 : index
    %c0_12 = arith.constant 0 : index
    %15 = vector.load %arg5[%c0_11, %c0_12] : memref<128x128xf32, #tpu.memory_space<vmem>>, vector<128x128xf32>
    %cst_13 = arith.constant dense<0.000000e+00> : vector<8x128xf32>
    %16 = tpu.matmul %14, %15, %cst_13 {dimension_numbers = #tpu.dot_dimension_numbers<[1], [0], [0], [1], [0, 0, 1, 1], [], []>} : vector<8x128xf32>, vector<128x128xf32>, vector<8x128xf32> -> vector<8x128xf32>
    %c2 = arith.constant 2 : index
    %c0_14 = arith.constant 0 : index
    %17 = vector.load %arg2[%c2, %c0_14] : memref<3x128xf32, #tpu.memory_space<vmem>>, vector<1x128xf32>
    %18 = vector.broadcast %17 : vector<1x128xf32> to vector<8x128xf32>
    %19 = arith.addf %16, %18 : vector<8x128xf32>
    %c0_15 = arith.constant 0 : index
    %c0_16 = arith.constant 0 : index
    %20 = vector.load %arg6[%c0_15, %c0_16] : memref<8x128xf32, #tpu.memory_space<vmem>>, vector<8x128xf32>
    tpu.vector_store %arg6[%c0_15, %c0_16], %19 {strides = array<i32>} : memref<8x128xf32, #tpu.memory_space<vmem>>, vector<8x128xf32>,
    return
  }
  func.func @transform_0(%arg0: i32) -> (i32, i32) {
    %c0_i32 = arith.constant 0 : i32
    %c0_i32_0 = arith.constant 0 : i32
    return %arg0, %c0_i32 : i32, i32
  }
  func.func @transform_1(%arg0: i32) -> (i32, i32) {
    %c0_i32 = arith.constant 0 : i32
    %c0_i32_0 = arith.constant 0 : i32
    %c0_i32_1 = arith.constant 0 : i32
    return %c0_i32, %c0_i32_0 : i32, i32
  }
  func.func @transform_2(%arg0: i32) -> (i32, i32) {
    %c0_i32 = arith.constant 0 : i32
    %c0_i32_0 = arith.constant 0 : i32
    %c0_i32_1 = arith.constant 0 : i32
    return %c0_i32, %c0_i32_0 : i32, i32
  }
  func.func @transform_3(%arg0: i32) -> (i32, i32) {
    %c0_i32 = arith.constant 0 : i32
    %c0_i32_0 = arith.constant 0 : i32
    %c0_i32_1 = arith.constant 0 : i32
    return %c0_i32, %c0_i32_0 : i32, i32
  }
  func.func @transform_4(%arg0: i32) -> (i32, i32) {
    %c0_i32 = arith.constant 0 : i32
    %c0_i32_0 = arith.constant 0 : i32
    %c0_i32_1 = arith.constant 0 : i32
    return %c0_i32, %c0_i32_0 : i32, i32
  }
  func.func @transform_5(%arg0: i32) -> (i32, i32) {
    %c0_i32 = arith.constant 0 : i32
    %c0_i32_0 = arith.constant 0 : i32
    return %arg0, %c0_i32 : i32, i32
  }
}

module attributes {stable_mosaic.version = 11 : i64} {
  func.func @_mlp_kernel(%arg0: i32, %arg1: memref<8x32xf32, #tpu.memory_space<vmem>>, %arg2: memref<3x128xf32, #tpu.memory_space<vmem>>, %arg3: memref<32x128xf32, #tpu.memory_space<vmem>>, %arg4: memref<128x128xf32, #tpu.memory_space<vmem>>, %arg5: memref<128x128xf32, #tpu.memory_space<vmem>>, %arg6: memref<8x128xf32, #tpu.memory_space<vmem>>) attributes {dimension_semantics = [#tpu.dimension_semantics<parallel>], iteration_bounds = array<i64: 1>, scalar_prefetch = 0 : i64, scratch_operands = 0 : i64, tpu.core_type = #tpu.core_type<tc>, window_params = [{transform_indices = @transform_0, window_bounds = array<i64: 8, 32>}, {pipeline_mode = #tpu.pipeline_mode<synchronous>, transform_indices = @transform_1, window_bounds = array<i64: 3, 128>}, {pipeline_mode = #tpu.pipeline_mode<synchronous>, transform_indices = @transform_2, window_bounds = array<i64: 32, 128>}, {pipeline_mode = #tpu.pipeline_mode<synchronous>, transform_indices = @transform_3, window_bounds = array<i64: 128, 128>}, {pipeline_mode = #tpu.pipeline_mode<synchronous>, transform_indices = @transform_4, window_bounds = array<i64: 128, 128>}, {transform_indices = @transform_5, window_bounds = array<i64: 8, 128>}]} {
    %c0 = arith.constant 0 : index
    %c0_0 = arith.constant 0 : index
    %0 = vector.load %arg1[%c0, %c0_0] : memref<8x32xf32, #tpu.memory_space<vmem>>, vector<8x32xf32>
    %c0_1 = arith.constant 0 : index
    %c0_2 = arith.constant 0 : index
    %1 = vector.load %arg3[%c0_1, %c0_2] : memref<32x128xf32, #tpu.memory_space<vmem>>, vector<32x128xf32>
    %cst = arith.constant dense<0.000000e+00> : vector<8x128xf32>
    %2 = tpu.matmul %0, %1, %cst {dimension_numbers = #tpu.dot_dimension_numbers<[1], [0], [0], [1], [0, 0, 1, 1], [], []>} : vector<8x32xf32>, vector<32x128xf32>, vector<8x128xf32> -> vector<8x128xf32>
    %c0_3 = arith.constant 0 : index
    %c0_4 = arith.constant 0 : index
    %3 = vector.load %arg2[%c0_3, %c0_4] : memref<3x128xf32, #tpu.memory_space<vmem>>, vector<1x128xf32>
    %4 = vector.broadcast %3 : vector<1x128xf32> to vector<8x128xf32>
    %5 = arith.addf %2, %4 : vector<8x128xf32>
    %cst_5 = arith.constant 0.000000e+00 : f32
    %6 = vector.broadcast %cst_5 : f32 to vector<8x128xf32>
    %7 = arith.maximumf %5, %6 : vector<8x128xf32>
    %c0_6 = arith.constant 0 : index
    %c0_7 = arith.constant 0 : index
    %8 = vector.load %arg4[%c0_6, %c0_7] : memref<128x128xf32, #tpu.memory_space<vmem>>, vector<128x128xf32>
    %cst_8 = arith.constant dense<0.000000e+00> : vector<8x128xf32>
    %9 = tpu.matmul %7, %8, %cst_8 {dimension_numbers = #tpu.dot_dimension_numbers<[1], [0], [0], [1], [0, 0, 1, 1], [], []>} : vector<8x128xf32>, vector<128x128xf32>, vector<8x128xf32> -> vector<8x128xf32>
    %c1 = arith.constant 1 : index
    %c0_9 = arith.constant 0 : index
    %10 = vector.load %arg2[%c1, %c0_9] : memref<3x128xf32, #tpu.memory_space<vmem>>, vector<1x128xf32>
    %11 = vector.broadcast %10 : vector<1x128xf32> to vector<8x128xf32>
    %12 = arith.addf %9, %11 : vector<8x128xf32>
    %cst_10 = arith.constant 0.000000e+00 : f32
    %13 = vector.broadcast %cst_10 : f32 to vector<8x128xf32>
    %14 = arith.maximumf %12, %13 : vector<8x128xf32>
    %c0_11 = arith.constant 0 : index
    %c0_12 = arith.constant 0 : index
    %15 = vector.load %arg5[%c0_11, %c0_12] : memref<128x128xf32, #tpu.memory_space<vmem>>, vector<128x128xf32>
    %cst_13 = arith.constant dense<0.000000e+00> : vector<8x128xf32>
    %16 = tpu.matmul %14, %15, %cst_13 {dimension_numbers = #tpu.dot_dimension_numbers<[1], [0], [0], [1], [0, 0, 1, 1], [], []>} : vector<8x128xf32>, vector<128x128xf32>, vector<8x128xf32> -> vector<8x128xf32>
    %c2 = arith.constant 2 : index
    %c0_14 = arith.constant 0 : index
    %17 = vector.load %arg2[%c2, %c0_14] : memref<3x128xf32, #tpu.memory_space<vmem>>, vector<1x128xf32>
    %18 = vector.broadcast %17 : vector<1x128xf32> to vector<8x128xf32>
    %19 = arith.addf %16, %18 : vector<8x128xf32>
    %c0_15 = arith.constant 0 : index
    %c0_16 = arith.constant 0 : index
    %20 = vector.load %arg6[%c0_15, %c0_16] : memref<8x128xf32, #tpu.memory_space<vmem>>, vector<8x128xf32>
    tpu.vector_store %arg6[%c0_15, %c0_16], %19 {strides = array<i32>} : memref<8x128xf32, #tpu.memory_space<vmem>>, vector<8x128xf32>,
    return
  }
  func.func @transform_0(%arg0: i32) -> (i32, i32) {
    %c0_i32 = arith.constant 0 : i32
    %c0_i32_0 = arith.constant 0 : i32
    return %arg0, %c0_i32 : i32, i32
  }
  func.func @transform_1(%arg0: i32) -> (i32, i32) {
    %c0_i32 = arith.constant 0 : i32
    %c0_i32_0 = arith.constant 0 : i32
    %c0_i32_1 = arith.constant 0 : i32
    return %c0_i32, %c0_i32_0 : i32, i32
  }
  func.func @transform_2(%arg0: i32) -> (i32, i32) {
    %c0_i32 = arith.constant 0 : i32
    %c0_i32_0 = arith.constant 0 : i32
    %c0_i32_1 = arith.constant 0 : i32
    return %c0_i32, %c0_i32_0 : i32, i32
  }
  func.func @transform_3(%arg0: i32) -> (i32, i32) {
    %c0_i32 = arith.constant 0 : i32
    %c0_i32_0 = arith.constant 0 : i32
    %c0_i32_1 = arith.constant 0 : i32
    return %c0_i32, %c0_i32_0 : i32, i32
  }
  func.func @transform_4(%arg0: i32) -> (i32, i32) {
    %c0_i32 = arith.constant 0 : i32
    %c0_i32_0 = arith.constant 0 : i32
    %c0_i32_1 = arith.constant 0 : i32
    return %c0_i32, %c0_i32_0 : i32, i32
  }
  func.func @transform_5(%arg0: i32) -> (i32, i32) {
    %c0_i32 = arith.constant 0 : i32
    %c0_i32_0 = arith.constant 0 : i32
    return %arg0, %c0_i32 : i32, i32
  }
}

</mosaic_0001>

<llo_original>
// kernel: tpu_custom_call.1
$region0: #{tpu_custom_call.1}
  #allocation0 [shape = 'u32[]', space=smem, size = 0x4, offset = 0x4, fixed_abs, tag = 'smem constant byte address 0x4 - core index']
  #allocation1 [shape = 'u32[144,128]{1,0:T(1,128)}', space=vmem, size = 0x12000, scoped, tag = 'internal scratch']
  %s0 = inlined_call_operand.hbm [shape: f32[8,32], index: 0, kind: input, shape index: {}]
  %s1 = inlined_call_operand.hbm [shape: f32[3,128], index: 1, kind: input, shape index: {}]
  %s2 = inlined_call_operand.hbm [shape: f32[32,128], index: 2, kind: input, shape index: {}]
  %s3 = inlined_call_operand.hbm [shape: f32[128,128], index: 3, kind: input, shape index: {}]
  %s4 = inlined_call_operand.hbm [shape: f32[128,128], index: 4, kind: input, shape index: {}]
  %s5 = inlined_call_operand.hbm [shape: f32[8,128], index: 5, kind: output, shape index: {}]
  %s6 = sld [smem:[#allocation0]]
  $region50: #{tpu_custom_call.1} parent=0
    _
  %s8 = ssub.s32 1, %s6
  %s9 = scalar_select 0, %s8, %s6
  $region1: #{tpu_custom_call.1} parent=0
    #allocation2 [shape = 'u8[4096]{0}', space=vmem, size = 0x1000, scoped, tag = 'input window, operand 0, single buffered']
    #allocation3 [shape = 's32[1]{0}', space=sflag, size = 0x4, scoped, tag = 'scoped memory for tpu_custom_call.1']
    #allocation4 [shape = 's32[1]{0}', space=sflag, size = 0x4, scoped, tag = 'scoped memory for tpu_custom_call.1']
    #allocation5 [shape = 'u8[2048]{0}', space=vmem, size = 0x800, scoped, tag = 'input window, operand 1, single buffered']
    #allocation6 [shape = 's32[1]{0}', space=sflag, size = 0x4, scoped, tag = 'scoped memory for tpu_custom_call.1']
    #allocation7 [shape = 'u8[16384]{0}', space=vmem, size = 0x4000, scoped, tag = 'input window, operand 2, single buffered']
    #allocation8 [shape = 'u8[65536]{0}', space=vmem, size = 0x10000, scoped, tag = 'input window, operand 3, single buffered']
    #allocation9 [shape = 's32[1]{0}', space=sflag, size = 0x4, scoped, tag = 'scoped memory for tpu_custom_call.1']
    #allocation10 [shape = 'u8[65536]{0}', space=vmem, size = 0x10000, scoped, tag = 'input window, operand 4, single buffered']
    #allocation11 [shape = 'u8[4096]{0}', space=vmem, size = 0x1000, scoped, tag = 'output window, operand 0, single buffered']
    %10 = vsyncpa [#allocation3], 0
    %11 = vsyncpa [#allocation6], 0
    %12 = vsyncpa [#allocation9], 0
    %13 = vsyncpa [#allocation4], 0
    // Predicated region
    $region2: #{tpu_custom_call.1} parent=1 // pred_check
      _
    $region3: #{tpu_custom_call.1} parent=1 // pred_check_branch
      %15 = sbr.rel (0) target = $region5
    $region4: #{tpu_custom_call.1} parent=1 // pred_region
      %s17 = ssub.s32 128, 128
      %18 = vsyncadd [#allocation3], %s17
      %s20 = sshll.u32 [#allocation2], 4
      %s21 = int_to_ptr.vmem [resolvable:$true] %s20
      %23 = dma.hbm_to_vmem [thread:$0]  %s0, 128, %s21, [#allocation3]
    $region5: #{tpu_custom_call.1} parent=1 // pred_fallthru
      _
    // Predicated region
    $region6: #{tpu_custom_call.1} parent=1 // pred_check
      _
    $region7: #{tpu_custom_call.1} parent=1 // pred_check_branch
      %25 = sbr.rel (0) target = $region9
    $region8: #{tpu_custom_call.1} parent=1 // pred_region
      %s27 = ssub.s32 64, 64
      %28 = vsyncadd [#allocation6], %s27
      %s30 = sshll.u32 [#allocation5], 4
      %s31 = int_to_ptr.vmem [resolvable:$true] %s30
      %33 = dma.hbm_to_vmem [thread:$0]  %s1, 64, %s31, [#allocation6]
    $region9: #{tpu_custom_call.1} parent=1 // pred_fallthru
      _
    // Predicated region
    $region10: #{tpu_custom_call.1} parent=1 // pred_check
      _
    $region11: #{tpu_custom_call.1} parent=1 // pred_check_branch
      %35 = sbr.rel (0) target = $region13
    $region12: #{tpu_custom_call.1} parent=1 // pred_region
      %s37 = ssub.s32 512, 512
      %38 = vsyncadd [#allocation6], %s37
      %s39 = sshll.u32 [#allocation7], 4
      %s40 = int_to_ptr.vmem [resolvable:$true] %s39
      %45 = dma.hbm_to_vmem [thread:$0]  %s2, 512, %s40, [#allocation6], 128, 128, 8
    $region13: #{tpu_custom_call.1} parent=1 // pred_fallthru
      _
    // Predicated region
    $region14: #{tpu_custom_call.1} parent=1 // pred_check
      _
    $region15: #{tpu_custom_call.1} parent=1 // pred_check_branch
      %47 = sbr.rel (0) target = $region17
    $region16: #{tpu_custom_call.1} parent=1 // pred_region
      %s49 = ssub.s32 2048, 2048
      %50 = vsyncadd [#allocation9], %s49
      %s51 = sshll.u32 [#allocation8], 4
      %s52 = int_to_ptr.vmem [resolvable:$true] %s51
      %57 = dma.hbm_to_vmem [thread:$0]  %s3, 2048, %s52, [#allocation9], 128, 128, 8
    $region17: #{tpu_custom_call.1} parent=1 // pred_fallthru
      _
    // Predicated region
    $region18: #{tpu_custom_call.1} parent=1 // pred_check
      _
    $region19: #{tpu_custom_call.1} parent=1 // pred_check_branch
      %59 = sbr.rel (0) target = $region21
    $region20: #{tpu_custom_call.1} parent=1 // pred_region
      %s61 = ssub.s32 2048, 2048
      %62 = vsyncadd [#allocation9], %s61
      %s63 = sshll.u32 [#allocation10], 4
      %s64 = int_to_ptr.vmem [resolvable:$true] %s63
      %69 = dma.hbm_to_vmem [thread:$0]  %s4, 2048, %s64, [#allocation9], 128, 128, 8
    $region21: #{tpu_custom_call.1} parent=1 // pred_fallthru
      _
    // Predicated region
    $region22: #{tpu_custom_call.1} parent=1 // pred_check
      _
    $region23: #{tpu_custom_call.1} parent=1 // pred_check_branch
      %71 = sbr.rel (0) target = $region25
    $region24: #{tpu_custom_call.1} parent=1 // pred_region
      %72 = dma.done [#allocation3], 128
    $region25: #{tpu_custom_call.1} parent=1 // pred_fallthru
      _
    // Predicated region
    $region26: #{tpu_custom_call.1} parent=1 // pred_check
      _
    $region27: #{tpu_custom_call.1} parent=1 // pred_check_branch
      %74 = sbr.rel (0) target = $region29
    $region28: #{tpu_custom_call.1} parent=1 // pred_region
      %75 = dma.done [#allocation6], 64
    $region29: #{tpu_custom_call.1} parent=1 // pred_fallthru
      _
    // Predicated region
    $region30: #{tpu_custom_call.1} parent=1 // pred_check
      _
    $region31: #{tpu_custom_call.1} parent=1 // pred_check_branch
      %77 = sbr.rel (0) target = $region33
    $region32: #{tpu_custom_call.1} parent=1 // pred_region
      %78 = dma.done [#allocation6], 512
    $region33: #{tpu_custom_call.1} parent=1 // pred_fallthru
      _
    // Predicated region
    $region34: #{tpu_custom_call.1} parent=1 // pred_check
      _
    $region35: #{tpu_custom_call.1} parent=1 // pred_check_branch
      %80 = sbr.rel (0) target = $region37
    $region36: #{tpu_custom_call.1} parent=1 // pred_region
      %81 = dma.done [#allocation9], 2048
    $region37: #{tpu_custom_call.1} parent=1 // pred_fallthru
      _
    // Predicated region
    $region38: #{tpu_custom_call.1} parent=1 // pred_check
      _
    $region39: #{tpu_custom_call.1} parent=1 // pred_check_branch
      %83 = sbr.rel (0) target = $region41
    $region40: #{tpu_custom_call.1} parent=1 // pred_region
      %84 = dma.done [#allocation9], 2048
    $region41: #{tpu_custom_call.1} parent=1 // pred_fallthru
      _
    %v85 = vld [vmem:[#allocation2] sm:$0xff]
    %v86 = vld [vmem:[#allocation7] sm:$0xff]
    %v87 = vld [vmem:[#allocation7 + $0x8] sm:$0xff]
    %v88 = vld [vmem:[#allocation7 + $0x10] sm:$0xff]
    %v89 = vld [vmem:[#allocation7 + $0x18] sm:$0xff]
    %v90 = vld [vmem:[#allocation5] sm:$0x1]
    %v91 = vlaneseq
    %v92 = vshrl.u32 %v91, 7
    %v93 = vsub.s32 0, %v92
    %v94 = vrot.slane %v90, %v93
    %vm95 = vcmask 261120
    %v97 = vsel %vm95, %v85, 0
    %99 = vmatprep.subr.mxu0 0.0
    %100 = vmatpush1.msra.mxu0 0.0
    %101 = vmatprep.subr.mxu0 0.0
    %102 = vmatpush1.msra.mxu0 0.0
    %103 = vmatprep.subr.mxu0 0.0
    %104 = vmatpush1.msra.mxu0 0.0
    %105 = vmatprep.subr.mxu0 0.0
    %106 = vmatpush1.msra.mxu0 0.0
    %107 = vmatprep.subr.mxu0 0.0
    %108 = vmatpush1.msra.mxu0 0.0
    %109 = vmatprep.subr.mxu0 0.0
    %110 = vmatpush1.msra.mxu0 0.0
    %111 = vmatprep.subr.mxu0 0.0
    %112 = vmatpush1.msra.mxu0 0.0
    %113 = vmatprep.subr.mxu0 0.0
    %114 = vmatpush1.msra.mxu0 0.0
    %115 = vmatprep.subr.mxu0 0.0
    %116 = vmatpush1.msra.mxu0 0.0
    %117 = vmatprep.subr.mxu0 0.0
    %118 = vmatpush1.msra.mxu0 0.0
    %119 = vmatprep.subr.mxu0 0.0
    %120 = vmatpush1.msra.mxu0 0.0
    %121 = vmatprep.subr.mxu0 0.0
    %122 = vmatpush1.msra.mxu0 0.0
    %123 = vmatprep.subr.mxu0 0.0
    %124 = vmatpush1.msra.mxu0 %v89
    %125 = vmatprep.subr.mxu0 0.0
    %126 = vmatpush1.msra.mxu0 %v88
    %127 = vmatprep.subr.mxu0 0.0
    %128 = vmatpush1.msra.mxu0 %v87
    %129 = vmatprep.subr.mxu0 0.0
    %130 = vmatpush1.msra.mxu0 %v86
    %131 = vmatprep.subr.mxu0 0.0
    %132 = vmatpush2.msra.mxu0 0.0
    %133 = vmatprep.subr.mxu0 0.0
    %134 = vmatpush2.msra.mxu0 0.0
    %135 = vmatprep.subr.mxu0 0.0
    %136 = vmatpush2.msra.mxu0 0.0
    %137 = vmatprep.subr.mxu0 0.0
    %138 = vmatpush2.msra.mxu0 0.0
    %139 = vmatprep.subr.mxu0 0.0
    %140 = vmatpush2.msra.mxu0 0.0
    %141 = vmatprep.subr.mxu0 0.0
    %142 = vmatpush2.msra.mxu0 0.0
    %143 = vmatprep.subr.mxu0 0.0
    %144 = vmatpush2.msra.mxu0 0.0
    %145 = vmatprep.subr.mxu0 0.0
    %146 = vmatpush2.msra.mxu0 0.0
    %147 = vmatprep.subr.mxu0 0.0
    %148 = vmatpush2.msra.mxu0 0.0
    %149 = vmatprep.subr.mxu0 0.0
    %150 = vmatpush2.msra.mxu0 0.0
    %151 = vmatprep.subr.mxu0 0.0
    %152 = vmatpush2.msra.mxu0 0.0
    %153 = vmatprep.subr.mxu0 0.0
    %154 = vmatpush2.msra.mxu0 0.0
    %155 = vmatprep.subr.mxu0 0.0
    %156 = vmatpush2.msra.mxu0 0.0
    %157 = vmatprep.subr.mxu0 0.0
    %158 = vmatpush2.msra.mxu0 0.0
    %159 = vmatprep.subr.mxu0 0.0
    %160 = vmatpush2.msra.mxu0 0.0
    %161 = vmatprep.subr.mxu0 0.0
    %162 = vmatpush2.msra.mxu0 0.0
    %163 = vmatprep.mubr.f32.mxu0 0.0
    %164 = vmatmul.mubr.f32.gmra.mxu0 %v97
    %v165 = vpop.f32.mrf.mxu0
    %v166 = vadd.f32 %v94, %v165
    %v167 = vpop.f32.mrf.mxu0
    %168 = vdwg.mxu0
    %v169 = vmax.f32 %v166, 0.0
    %v170 = vld [vmem:[#allocation8] sm:$0xff]
    %v171 = vld [vmem:[#allocation8 + $0x8] sm:$0xff]
    %v172 = vld [vmem:[#allocation8 + $0x10] sm:$0xff]
    %v173 = vld [vmem:[#allocation8 + $0x18] sm:$0xff]
    %v174 = vld [vmem:[#allocation8 + $0x20] sm:$0xff]
    %v175 = vld [vmem:[#allocation8 + $0x28] sm:$0xff]
    %v176 = vld [vmem:[#allocation8 + $0x30] sm:$0xff]
    %v177 = vld [vmem:[#allocation8 + $0x38] sm:$0xff]
    %v178 = vld [vmem:[#allocation8 + $0x40] sm:$0xff]
    %v179 = vld [vmem:[#allocation8 + $0x48] sm:$0xff]
    %v180 = vld [vmem:[#allocation8 + $0x50] sm:$0xff]
    %v181 = vld [vmem:[#allocation8 + $0x58] sm:$0xff]
    %v182 = vld [vmem:[#allocation8 + $0x60] sm:$0xff]
    %v183 = vld [vmem:[#allocation8 + $0x68] sm:$0xff]
    %v184 = vld [vmem:[#allocation8 + $0x70] sm:$0xff]
    %v185 = vld [vmem:[#allocation8 + $0x78] sm:$0xff]
    %v186 = vld [vmem:[#allocation5 + $0x1] sm:$0x1]
    %v187 = vlaneseq
    %v188 = vshrl.u32 %v187, 7
    %v189 = vsub.s32 0, %v188
    %v190 = vrot.slane %v186, %v189
    %191 = vmatprep.subr.mxu0 0.0
    %192 = vmatpush1.msra.mxu0 %v185
    %193 = vmatprep.subr.mxu0 0.0
    %194 = vmatpush1.msra.mxu0 %v184
    %195 = vmatprep.subr.mxu0 0.0
    %196 = vmatpush1.msra.mxu0 %v183
    %197 = vmatprep.subr.mxu0 0.0
    %198 = vmatpush1.msra.mxu0 %v182
    %199 = vmatprep.subr.mxu0 0.0
    %200 = vmatpush1.msra.mxu0 %v181
    %201 = vmatprep.subr.mxu0 0.0
    %202 = vmatpush1.msra.mxu0 %v180
    %203 = vmatprep.subr.mxu0 0.0
    %204 = vmatpush1.msra.mxu0 %v179
    %205 = vmatprep.subr.mxu0 0.0
    %206 = vmatpush1.msra.mxu0 %v178
    %207 = vmatprep.subr.mxu0 0.0
    %208 = vmatpush1.msra.mxu0 %v177
    %209 = vmatprep.subr.mxu0 0.0
    %210 = vmatpush1.msra.mxu0 %v176
    %211 = vmatprep.subr.mxu0 0.0
    %212 = vmatpush1.msra.mxu0 %v175
    %213 = vmatprep.subr.mxu0 0.0
    %214 = vmatpush1.msra.mxu0 %v174
    %215 = vmatprep.subr.mxu0 0.0
    %216 = vmatpush1.msra.mxu0 %v173
    %217 = vmatprep.subr.mxu0 0.0
    %218 = vmatpush1.msra.mxu0 %v172
    %219 = vmatprep.subr.mxu0 0.0
    %220 = vmatpush1.msra.mxu0 %v171
    %221 = vmatprep.subr.mxu0 0.0
    %222 = vmatpush1.msra.mxu0 %v170
    %223 = vmatprep.subr.mxu0 0.0
    %224 = vmatpush2.msra.mxu0 0.0
    %225 = vmatprep.subr.mxu0 0.0
    %226 = vmatpush2.msra.mxu0 0.0
    %227 = vmatprep.subr.mxu0 0.0
    %228 = vmatpush2.msra.mxu0 0.0
    %229 = vmatprep.subr.mxu0 0.0
    %230 = vmatpush2.msra.mxu0 0.0
    %231 = vmatprep.subr.mxu0 0.0
    %232 = vmatpush2.msra.mxu0 0.0
    %233 = vmatprep.subr.mxu0 0.0
    %234 = vmatpush2.msra.mxu0 0.0
    %235 = vmatprep.subr.mxu0 0.0
    %236 = vmatpush2.msra.mxu0 0.0
    %237 = vmatprep.subr.mxu0 0.0
    %238 = vmatpush2.msra.mxu0 0.0
    %239 = vmatprep.subr.mxu0 0.0
    %240 = vmatpush2.msra.mxu0 0.0
    %241 = vmatprep.subr.mxu0 0.0
    %242 = vmatpush2.msra.mxu0 0.0
    %243 = vmatprep.subr.mxu0 0.0
    %244 = vmatpush2.msra.mxu0 0.0
    %245 = vmatprep.subr.mxu0 0.0
    %246 = vmatpush2.msra.mxu0 0.0
    %247 = vmatprep.subr.mxu0 0.0
    %248 = vmatpush2.msra.mxu0 0.0
    %249 = vmatprep.subr.mxu0 0.0
    %250 = vmatpush2.msra.mxu0 0.0
    %251 = vmatprep.subr.mxu0 0.0
    %252 = vmatpush2.msra.mxu0 0.0
    %253 = vmatprep.subr.mxu0 0.0
    %254 = vmatpush2.msra.mxu0 0.0
    %255 = vmatprep.mubr.f32.mxu0 0.0
    %256 = vmatmul.mubr.f32.gmra.mxu0 %v169
    %v257 = vpop.f32.mrf.mxu0
    %v258 = vadd.f32 %v190, %v257
    %v259 = vpop.f32.mrf.mxu0
    %260 = vdwg.mxu0
    %v261 = vmax.f32 %v258, 0.0
    %v262 = vld [vmem:[#allocation10] sm:$0xff]
    %v263 = vld [vmem:[#allocation10 + $0x8] sm:$0xff]
    %v264 = vld [vmem:[#allocation10 + $0x10] sm:$0xff]
    %v265 = vld [vmem:[#allocation10 + $0x18] sm:$0xff]
    %v266 = vld [vmem:[#allocation10 + $0x20] sm:$0xff]
    %v267 = vld [vmem:[#allocation10 + $0x28] sm:$0xff]
    %v268 = vld [vmem:[#allocation10 + $0x30] sm:$0xff]
    %v269 = vld [vmem:[#allocation10 + $0x38] sm:$0xff]
    %v270 = vld [vmem:[#allocation10 + $0x40] sm:$0xff]
    %v271 = vld [vmem:[#allocation10 + $0x48] sm:$0xff]
    %v272 = vld [vmem:[#allocation10 + $0x50] sm:$0xff]
    %v273 = vld [vmem:[#allocation10 + $0x58] sm:$0xff]
    %v274 = vld [vmem:[#allocation10 + $0x60] sm:$0xff]
    %v275 = vld [vmem:[#allocation10 + $0x68] sm:$0xff]
    %v276 = vld [vmem:[#allocation10 + $0x70] sm:$0xff]
    %v277 = vld [vmem:[#allocation10 + $0x78] sm:$0xff]
    %v278 = vld [vmem:[#allocation5 + $0x2] sm:$0x1]
    %v279 = vlaneseq
    %v280 = vshrl.u32 %v279, 7
    %v281 = vsub.s32 0, %v280
    %v282 = vrot.slane %v278, %v281
    %283 = vmatprep.subr.mxu0 0.0
    %284 = vmatpush1.msra.mxu0 %v277
    %285 = vmatprep.subr.mxu0 0.0
    %286 = vmatpush1.msra.mxu0 %v276
    %287 = vmatprep.subr.mxu0 0.0
    %288 = vmatpush1.msra.mxu0 %v275
    %289 = vmatprep.subr.mxu0 0.0
    %290 = vmatpush1.msra.mxu0 %v274
    %291 = vmatprep.subr.mxu0 0.0
    %292 = vmatpush1.msra.mxu0 %v273
    %293 = vmatprep.subr.mxu0 0.0
    %294 = vmatpush1.msra.mxu0 %v272
    %295 = vmatprep.subr.mxu0 0.0
    %296 = vmatpush1.msra.mxu0 %v271
    %297 = vmatprep.subr.mxu0 0.0
    %298 = vmatpush1.msra.mxu0 %v270
    %299 = vmatprep.subr.mxu0 0.0
    %300 = vmatpush1.msra.mxu0 %v269
    %301 = vmatprep.subr.mxu0 0.0
    %302 = vmatpush1.msra.mxu0 %v268
    %303 = vmatprep.subr.mxu0 0.0
    %304 = vmatpush1.msra.mxu0 %v267
    %305 = vmatprep.subr.mxu0 0.0
    %306 = vmatpush1.msra.mxu0 %v266
    %307 = vmatprep.subr.mxu0 0.0
    %308 = vmatpush1.msra.mxu0 %v265
    %309 = vmatprep.subr.mxu0 0.0
    %310 = vmatpush1.msra.mxu0 %v264
    %311 = vmatprep.subr.mxu0 0.0
    %312 = vmatpush1.msra.mxu0 %v263
    %313 = vmatprep.subr.mxu0 0.0
    %314 = vmatpush1.msra.mxu0 %v262
    %315 = vmatprep.subr.mxu0 0.0
    %316 = vmatpush2.msra.mxu0 0.0
    %317 = vmatprep.subr.mxu0 0.0
    %318 = vmatpush2.msra.mxu0 0.0
    %319 = vmatprep.subr.mxu0 0.0
    %320 = vmatpush2.msra.mxu0 0.0
    %321 = vmatprep.subr.mxu0 0.0
    %322 = vmatpush2.msra.mxu0 0.0
    %323 = vmatprep.subr.mxu0 0.0
    %324 = vmatpush2.msra.mxu0 0.0
    %325 = vmatprep.subr.mxu0 0.0
    %326 = vmatpush2.msra.mxu0 0.0
    %327 = vmatprep.subr.mxu0 0.0
    %328 = vmatpush2.msra.mxu0 0.0
    %329 = vmatprep.subr.mxu0 0.0
    %330 = vmatpush2.msra.mxu0 0.0
    %331 = vmatprep.subr.mxu0 0.0
    %332 = vmatpush2.msra.mxu0 0.0
    %333 = vmatprep.subr.mxu0 0.0
    %334 = vmatpush2.msra.mxu0 0.0
    %335 = vmatprep.subr.mxu0 0.0
    %336 = vmatpush2.msra.mxu0 0.0
    %337 = vmatprep.subr.mxu0 0.0
    %338 = vmatpush2.msra.mxu0 0.0
    %339 = vmatprep.subr.mxu0 0.0
    %340 = vmatpush2.msra.mxu0 0.0
    %341 = vmatprep.subr.mxu0 0.0
    %342 = vmatpush2.msra.mxu0 0.0
    %343 = vmatprep.subr.mxu0 0.0
    %344 = vmatpush2.msra.mxu0 0.0
    %345 = vmatprep.subr.mxu0 0.0
    %346 = vmatpush2.msra.mxu0 0.0
    %347 = vmatprep.mubr.f32.mxu0 0.0
    %348 = vmatmul.mubr.f32.gmra.mxu0 %v261
    %v349 = vpop.f32.mrf.mxu0
    %v350 = vadd.f32 %v282, %v349
    %v351 = vpop.f32.mrf.mxu0
    %352 = vdwg.mxu0
    %353 = vst [vmem:[#allocation11] sm:$0xff] %v350
    // Predicated region
    $region42: #{tpu_custom_call.1} parent=1 // pred_check
      _
    $region43: #{tpu_custom_call.1} parent=1 // pred_check_branch
      %355 = sbr.rel (0) target = $region45
    $region44: #{tpu_custom_call.1} parent=1 // pred_region
      %s357 = ssub.s32 128, 128
      %358 = vsyncadd [#allocation4], %s357
      %s360 = sshll.u32 [#allocation11], 4
      %s361 = int_to_ptr.vmem [resolvable:$true] %s360
      %363 = dma.vmem_to_hbm [thread:$0]  %s361, 128, %s5, [#allocation4]
    $region45: #{tpu_custom_call.1} parent=1 // pred_fallthru
      _
    // Predicated region
    $region46: #{tpu_custom_call.1} parent=1 // pred_check
      _
    $region47: #{tpu_custom_call.1} parent=1 // pred_check_branch
      %365 = sbr.rel (0) target = $region49
    $region48: #{tpu_custom_call.1} parent=1 // pred_region
      %366 = dma.done [#allocation4], 128
    $region49: #{tpu_custom_call.1} parent=1 // pred_fallthru
      _
    %367 = vsyncpa [#allocation3], 1
    %368 = vsyncpa [#allocation6], 1
    %369 = vsyncpa [#allocation9], 1
    %370 = vsyncpa [#allocation4], 1

// kernel: tpu_custom_call.1
$region0: #{tpu_custom_call.1}
  #allocation0 [shape = 'u32[]', space=smem, size = 0x4, offset = 0x4, fixed_abs, tag = 'smem constant byte address 0x4 - core index']
  #allocation1 [shape = 'u32[144,128]{1,0:T(1,128)}', space=vmem, size = 0x12000, scoped, tag = 'internal scratch']
  %s0 = inlined_call_operand.hbm [shape: f32[8,32], index: 0, kind: input, shape index: {}]
  %s1 = inlined_call_operand.hbm [shape: f32[3,128], index: 1, kind: input, shape index: {}]
  %s2 = inlined_call_operand.hbm [shape: f32[32,128], index: 2, kind: input, shape index: {}]
  %s3 = inlined_call_operand.hbm [shape: f32[128,128], index: 3, kind: input, shape index: {}]
  %s4 = inlined_call_operand.hbm [shape: f32[128,128], index: 4, kind: input, shape index: {}]
  %s5 = inlined_call_operand.hbm [shape: f32[8,128], index: 5, kind: output, shape index: {}]
  %s6 = sld [smem:[#allocation0]]
  $region50: #{tpu_custom_call.1} parent=0
    _
  %s8 = ssub.s32 1, %s6
  %s9 = scalar_select 0, %s8, %s6
  $region1: #{tpu_custom_call.1} parent=0
    #allocation2 [shape = 'u8[4096]{0}', space=vmem, size = 0x1000, scoped, tag = 'input window, operand 0, single buffered']
    #allocation3 [shape = 's32[1]{0}', space=sflag, size = 0x4, scoped, tag = 'scoped memory for tpu_custom_call.1']
    #allocation4 [shape = 's32[1]{0}', space=sflag, size = 0x4, scoped, tag = 'scoped memory for tpu_custom_call.1']
    #allocation5 [shape = 'u8[2048]{0}', space=vmem, size = 0x800, scoped, tag = 'input window, operand 1, single buffered']
    #allocation6 [shape = 's32[1]{0}', space=sflag, size = 0x4, scoped, tag = 'scoped memory for tpu_custom_call.1']
    #allocation7 [shape = 'u8[16384]{0}', space=vmem, size = 0x4000, scoped, tag = 'input window, operand 2, single buffered']
    #allocation8 [shape = 'u8[65536]{0}', space=vmem, size = 0x10000, scoped, tag = 'input window, operand 3, single buffered']
    #allocation9 [shape = 's32[1]{0}', space=sflag, size = 0x4, scoped, tag = 'scoped memory for tpu_custom_call.1']
    #allocation10 [shape = 'u8[65536]{0}', space=vmem, size = 0x10000, scoped, tag = 'input window, operand 4, single buffered']
    #allocation11 [shape = 'u8[4096]{0}', space=vmem, size = 0x1000, scoped, tag = 'output window, operand 0, single buffered']
    %10 = vsyncpa [#allocation3], 0
    %11 = vsyncpa [#allocation6], 0
    %12 = vsyncpa [#allocation9], 0
    %13 = vsyncpa [#allocation4], 0
    // Predicated region
    $region2: #{tpu_custom_call.1} parent=1 // pred_check
      _
    $region3: #{tpu_custom_call.1} parent=1 // pred_check_branch
      %15 = sbr.rel (0) target = $region5
    $region4: #{tpu_custom_call.1} parent=1 // pred_region
      %s17 = ssub.s32 128, 128
      %18 = vsyncadd [#allocation3], %s17
      %s20 = sshll.u32 [#allocation2], 4
      %s21 = int_to_ptr.vmem [resolvable:$true] %s20
      %23 = dma.hbm_to_vmem [thread:$0]  %s0, 128, %s21, [#allocation3]
    $region5: #{tpu_custom_call.1} parent=1 // pred_fallthru
      _
    // Predicated region
    $region6: #{tpu_custom_call.1} parent=1 // pred_check
      _
    $region7: #{tpu_custom_call.1} parent=1 // pred_check_branch
      %25 = sbr.rel (0) target = $region9
    $region8: #{tpu_custom_call.1} parent=1 // pred_region
      %s27 = ssub.s32 64, 64
      %28 = vsyncadd [#allocation6], %s27
      %s30 = sshll.u32 [#allocation5], 4
      %s31 = int_to_ptr.vmem [resolvable:$true] %s30
      %33 = dma.hbm_to_vmem [thread:$0]  %s1, 64, %s31, [#allocation6]
    $region9: #{tpu_custom_call.1} parent=1 // pred_fallthru
      _
    // Predicated region
    $region10: #{tpu_custom_call.1} parent=1 // pred_check
      _
    $region11: #{tpu_custom_call.1} parent=1 // pred_check_branch
      %35 = sbr.rel (0) target = $region13
    $region12: #{tpu_custom_call.1} parent=1 // pred_region
      %s37 = ssub.s32 512, 512
      %38 = vsyncadd [#allocation6], %s37
      %s39 = sshll.u32 [#allocation7], 4
      %s40 = int_to_ptr.vmem [resolvable:$true] %s39
      %45 = dma.hbm_to_vmem [thread:$0]  %s2, 512, %s40, [#allocation6], 128, 128, 8
    $region13: #{tpu_custom_call.1} parent=1 // pred_fallthru
      _
    // Predicated region
    $region14: #{tpu_custom_call.1} parent=1 // pred_check
      _
    $region15: #{tpu_custom_call.1} parent=1 // pred_check_branch
      %47 = sbr.rel (0) target = $region17
    $region16: #{tpu_custom_call.1} parent=1 // pred_region
      %s49 = ssub.s32 2048, 2048
      %50 = vsyncadd [#allocation9], %s49
      %s51 = sshll.u32 [#allocation8], 4
      %s52 = int_to_ptr.vmem [resolvable:$true] %s51
      %57 = dma.hbm_to_vmem [thread:$0]  %s3, 2048, %s52, [#allocation9], 128, 128, 8
    $region17: #{tpu_custom_call.1} parent=1 // pred_fallthru
      _
    // Predicated region
    $region18: #{tpu_custom_call.1} parent=1 // pred_check
      _
    $region19: #{tpu_custom_call.1} parent=1 // pred_check_branch
      %59 = sbr.rel (0) target = $region21
    $region20: #{tpu_custom_call.1} parent=1 // pred_region
      %s61 = ssub.s32 2048, 2048
      %62 = vsyncadd [#allocation9], %s61
      %s63 = sshll.u32 [#allocation10], 4
      %s64 = int_to_ptr.vmem [resolvable:$true] %s63
      %69 = dma.hbm_to_vmem [thread:$0]  %s4, 2048, %s64, [#allocation9], 128, 128, 8
    $region21: #{tpu_custom_call.1} parent=1 // pred_fallthru
      _
    // Predicated region
    $region22: #{tpu_custom_call.1} parent=1 // pred_check
      _
    $region23: #{tpu_custom_call.1} parent=1 // pred_check_branch
      %71 = sbr.rel (0) target = $region25
    $region24: #{tpu_custom_call.1} parent=1 // pred_region
      %72 = dma.done [#allocation3], 128
    $region25: #{tpu_custom_call.1} parent=1 // pred_fallthru
      _
    // Predicated region
    $region26: #{tpu_custom_call.1} parent=1 // pred_check
      _
    $region27: #{tpu_custom_call.1} parent=1 // pred_check_branch
      %74 = sbr.rel (0) target = $region29
    $region28: #{tpu_custom_call.1} parent=1 // pred_region
      %75 = dma.done [#allocation6], 64
    $region29: #{tpu_custom_call.1} parent=1 // pred_fallthru
      _
    // Predicated region
    $region30: #{tpu_custom_call.1} parent=1 // pred_check
      _
    $region31: #{tpu_custom_call.1} parent=1 // pred_check_branch
      %77 = sbr.rel (0) target = $region33
    $region32: #{tpu_custom_call.1} parent=1 // pred_region
      %78 = dma.done [#allocation6], 512
    $region33: #{tpu_custom_call.1} parent=1 // pred_fallthru
      _
    // Predicated region
    $region34: #{tpu_custom_call.1} parent=1 // pred_check
      _
    $region35: #{tpu_custom_call.1} parent=1 // pred_check_branch
      %80 = sbr.rel (0) target = $region37
    $region36: #{tpu_custom_call.1} parent=1 // pred_region
      %81 = dma.done [#allocation9], 2048
    $region37: #{tpu_custom_call.1} parent=1 // pred_fallthru
      _
    // Predicated region
    $region38: #{tpu_custom_call.1} parent=1 // pred_check
      _
    $region39: #{tpu_custom_call.1} parent=1 // pred_check_branch
      %83 = sbr.rel (0) target = $region41
    $region40: #{tpu_custom_call.1} parent=1 // pred_region
      %84 = dma.done [#allocation9], 2048
    $region41: #{tpu_custom_call.1} parent=1 // pred_fallthru
      _
    %v85 = vld [vmem:[#allocation2] sm:$0xff]
    %v86 = vld [vmem:[#allocation7] sm:$0xff]
    %v87 = vld [vmem:[#allocation7 + $0x8] sm:$0xff]
    %v88 = vld [vmem:[#allocation7 + $0x10] sm:$0xff]
    %v89 = vld [vmem:[#allocation7 + $0x18] sm:$0xff]
    %v90 = vld [vmem:[#allocation5] sm:$0x1]
    %v91 = vlaneseq
    %v92 = vshrl.u32 %v91, 7
    %v93 = vsub.s32 0, %v92
    %v94 = vrot.slane %v90, %v93
    %vm95 = vcmask 261120
    %v97 = vsel %vm95, %v85, 0
    %99 = vmatprep.subr.mxu0 0.0
    %100 = vmatpush1.msra.mxu0 0.0
    %101 = vmatprep.subr.mxu0 0.0
    %102 = vmatpush1.msra.mxu0 0.0
    %103 = vmatprep.subr.mxu0 0.0
    %104 = vmatpush1.msra.mxu0 0.0
    %105 = vmatprep.subr.mxu0 0.0
    %106 = vmatpush1.msra.mxu0 0.0
    %107 = vmatprep.subr.mxu0 0.0
    %108 = vmatpush1.msra.mxu0 0.0
    %109 = vmatprep.subr.mxu0 0.0
    %110 = vmatpush1.msra.mxu0 0.0
    %111 = vmatprep.subr.mxu0 0.0
    %112 = vmatpush1.msra.mxu0 0.0
    %113 = vmatprep.subr.mxu0 0.0
    %114 = vmatpush1.msra.mxu0 0.0
    %115 = vmatprep.subr.mxu0 0.0
    %116 = vmatpush1.msra.mxu0 0.0
    %117 = vmatprep.subr.mxu0 0.0
    %118 = vmatpush1.msra.mxu0 0.0
    %119 = vmatprep.subr.mxu0 0.0
    %120 = vmatpush1.msra.mxu0 0.0
    %121 = vmatprep.subr.mxu0 0.0
    %122 = vmatpush1.msra.mxu0 0.0
    %123 = vmatprep.subr.mxu0 0.0
    %124 = vmatpush1.msra.mxu0 %v89
    %125 = vmatprep.subr.mxu0 0.0
    %126 = vmatpush1.msra.mxu0 %v88
    %127 = vmatprep.subr.mxu0 0.0
    %128 = vmatpush1.msra.mxu0 %v87
    %129 = vmatprep.subr.mxu0 0.0
    %130 = vmatpush1.msra.mxu0 %v86
    %131 = vmatprep.subr.mxu0 0.0
    %132 = vmatpush2.msra.mxu0 0.0
    %133 = vmatprep.subr.mxu0 0.0
    %134 = vmatpush2.msra.mxu0 0.0
    %135 = vmatprep.subr.mxu0 0.0
    %136 = vmatpush2.msra.mxu0 0.0
    %137 = vmatprep.subr.mxu0 0.0
    %138 = vmatpush2.msra.mxu0 0.0
    %139 = vmatprep.subr.mxu0 0.0
    %140 = vmatpush2.msra.mxu0 0.0
    %141 = vmatprep.subr.mxu0 0.0
    %142 = vmatpush2.msra.mxu0 0.0
    %143 = vmatprep.subr.mxu0 0.0
    %144 = vmatpush2.msra.mxu0 0.0
    %145 = vmatprep.subr.mxu0 0.0
    %146 = vmatpush2.msra.mxu0 0.0
    %147 = vmatprep.subr.mxu0 0.0
    %148 = vmatpush2.msra.mxu0 0.0
    %149 = vmatprep.subr.mxu0 0.0
    %150 = vmatpush2.msra.mxu0 0.0
    %151 = vmatprep.subr.mxu0 0.0
    %152 = vmatpush2.msra.mxu0 0.0
    %153 = vmatprep.subr.mxu0 0.0
    %154 = vmatpush2.msra.mxu0 0.0
    %155 = vmatprep.subr.mxu0 0.0
    %156 = vmatpush2.msra.mxu0 0.0
    %157 = vmatprep.subr.mxu0 0.0
    %158 = vmatpush2.msra.mxu0 0.0
    %159 = vmatprep.subr.mxu0 0.0
    %160 = vmatpush2.msra.mxu0 0.0
    %161 = vmatprep.subr.mxu0 0.0
    %162 = vmatpush2.msra.mxu0 0.0
    %163 = vmatprep.mubr.f32.mxu0 0.0
    %164 = vmatmul.mubr.f32.gmra.mxu0 %v97
    %v165 = vpop.f32.mrf.mxu0
    %v166 = vadd.f32 %v94, %v165
    %v167 = vpop.f32.mrf.mxu0
    %168 = vdwg.mxu0
    %v169 = vmax.f32 %v166, 0.0
    %v170 = vld [vmem:[#allocation8] sm:$0xff]
    %v171 = vld [vmem:[#allocation8 + $0x8] sm:$0xff]
    %v172 = vld [vmem:[#allocation8 + $0x10] sm:$0xff]
    %v173 = vld [vmem:[#allocation8 + $0x18] sm:$0xff]
    %v174 = vld [vmem:[#allocation8 + $0x20] sm:$0xff]
    %v175 = vld [vmem:[#allocation8 + $0x28] sm:$0xff]
    %v176 = vld [vmem:[#allocation8 + $0x30] sm:$0xff]
    %v177 = vld [vmem:[#allocation8 + $0x38] sm:$0xff]
    %v178 = vld [vmem:[#allocation8 + $0x40] sm:$0xff]
    %v179 = vld [vmem:[#allocation8 + $0x48] sm:$0xff]
    %v180 = vld [vmem:[#allocation8 + $0x50] sm:$0xff]
    %v181 = vld [vmem:[#allocation8 + $0x58] sm:$0xff]
    %v182 = vld [vmem:[#allocation8 + $0x60] sm:$0xff]
    %v183 = vld [vmem:[#allocation8 + $0x68] sm:$0xff]
    %v184 = vld [vmem:[#allocation8 + $0x70] sm:$0xff]
    %v185 = vld [vmem:[#allocation8 + $0x78] sm:$0xff]
    %v186 = vld [vmem:[#allocation5 + $0x1] sm:$0x1]
    %v187 = vlaneseq
    %v188 = vshrl.u32 %v187, 7
    %v189 = vsub.s32 0, %v188
    %v190 = vrot.slane %v186, %v189
    %191 = vmatprep.subr.mxu0 0.0
    %192 = vmatpush1.msra.mxu0 %v185
    %193 = vmatprep.subr.mxu0 0.0
    %194 = vmatpush1.msra.mxu0 %v184
    %195 = vmatprep.subr.mxu0 0.0
    %196 = vmatpush1.msra.mxu0 %v183
    %197 = vmatprep.subr.mxu0 0.0
    %198 = vmatpush1.msra.mxu0 %v182
    %199 = vmatprep.subr.mxu0 0.0
    %200 = vmatpush1.msra.mxu0 %v181
    %201 = vmatprep.subr.mxu0 0.0
    %202 = vmatpush1.msra.mxu0 %v180
    %203 = vmatprep.subr.mxu0 0.0
    %204 = vmatpush1.msra.mxu0 %v179
    %205 = vmatprep.subr.mxu0 0.0
    %206 = vmatpush1.msra.mxu0 %v178
    %207 = vmatprep.subr.mxu0 0.0
    %208 = vmatpush1.msra.mxu0 %v177
    %209 = vmatprep.subr.mxu0 0.0
    %210 = vmatpush1.msra.mxu0 %v176
    %211 = vmatprep.subr.mxu0 0.0
    %212 = vmatpush1.msra.mxu0 %v175
    %213 = vmatprep.subr.mxu0 0.0
    %214 = vmatpush1.msra.mxu0 %v174
    %215 = vmatprep.subr.mxu0 0.0
    %216 = vmatpush1.msra.mxu0 %v173
    %217 = vmatprep.subr.mxu0 0.0
    %218 = vmatpush1.msra.mxu0 %v172
    %219 = vmatprep.subr.mxu0 0.0
    %220 = vmatpush1.msra.mxu0 %v171
    %221 = vmatprep.subr.mxu0 0.0
    %222 = vmatpush1.msra.mxu0 %v170
    %223 = vmatprep.subr.mxu0 0.0
    %224 = vmatpush2.msra.mxu0 0.0
    %225 = vmatprep.subr.mxu0 0.0
    %226 = vmatpush2.msra.mxu0 0.0
    %227 = vmatprep.subr.mxu0 0.0
    %228 = vmatpush2.msra.mxu0 0.0
    %229 = vmatprep.subr.mxu0 0.0
    %230 = vmatpush2.msra.mxu0 0.0
    %231 = vmatprep.subr.mxu0 0.0
    %232 = vmatpush2.msra.mxu0 0.0
    %233 = vmatprep.subr.mxu0 0.0
    %234 = vmatpush2.msra.mxu0 0.0
    %235 = vmatprep.subr.mxu0 0.0
    %236 = vmatpush2.msra.mxu0 0.0
    %237 = vmatprep.subr.mxu0 0.0
    %238 = vmatpush2.msra.mxu0 0.0
    %239 = vmatprep.subr.mxu0 0.0
    %240 = vmatpush2.msra.mxu0 0.0
    %241 = vmatprep.subr.mxu0 0.0
    %242 = vmatpush2.msra.mxu0 0.0
    %243 = vmatprep.subr.mxu0 0.0
    %244 = vmatpush2.msra.mxu0 0.0
    %245 = vmatprep.subr.mxu0 0.0
    %246 = vmatpush2.msra.mxu0 0.0
    %247 = vmatprep.subr.mxu0 0.0
    %248 = vmatpush2.msra.mxu0 0.0
    %249 = vmatprep.subr.mxu0 0.0
    %250 = vmatpush2.msra.mxu0 0.0
    %251 = vmatprep.subr.mxu0 0.0
    %252 = vmatpush2.msra.mxu0 0.0
    %253 = vmatprep.subr.mxu0 0.0
    %254 = vmatpush2.msra.mxu0 0.0
    %255 = vmatprep.mubr.f32.mxu0 0.0
    %256 = vmatmul.mubr.f32.gmra.mxu0 %v169
    %v257 = vpop.f32.mrf.mxu0
    %v258 = vadd.f32 %v190, %v257
    %v259 = vpop.f32.mrf.mxu0
    %260 = vdwg.mxu0
    %v261 = vmax.f32 %v258, 0.0
    %v262 = vld [vmem:[#allocation10] sm:$0xff]
    %v263 = vld [vmem:[#allocation10 + $0x8] sm:$0xff]
    %v264 = vld [vmem:[#allocation10 + $0x10] sm:$0xff]
    %v265 = vld [vmem:[#allocation10 + $0x18] sm:$0xff]
    %v266 = vld [vmem:[#allocation10 + $0x20] sm:$0xff]
    %v267 = vld [vmem:[#allocation10 + $0x28] sm:$0xff]
    %v268 = vld [vmem:[#allocation10 + $0x30] sm:$0xff]
    %v269 = vld [vmem:[#allocation10 + $0x38] sm:$0xff]
    %v270 = vld [vmem:[#allocation10 + $0x40] sm:$0xff]
    %v271 = vld [vmem:[#allocation10 + $0x48] sm:$0xff]
    %v272 = vld [vmem:[#allocation10 + $0x50] sm:$0xff]
    %v273 = vld [vmem:[#allocation10 + $0x58] sm:$0xff]
    %v274 = vld [vmem:[#allocation10 + $0x60] sm:$0xff]
    %v275 = vld [vmem:[#allocation10 + $0x68] sm:$0xff]
    %v276 = vld [vmem:[#allocation10 + $0x70] sm:$0xff]
    %v277 = vld [vmem:[#allocation10 + $0x78] sm:$0xff]
    %v278 = vld [vmem:[#allocation5 + $0x2] sm:$0x1]
    %v279 = vlaneseq
    %v280 = vshrl.u32 %v279, 7
    %v281 = vsub.s32 0, %v280
    %v282 = vrot.slane %v278, %v281
    %283 = vmatprep.subr.mxu0 0.0
    %284 = vmatpush1.msra.mxu0 %v277
    %285 = vmatprep.subr.mxu0 0.0
    %286 = vmatpush1.msra.mxu0 %v276
    %287 = vmatprep.subr.mxu0 0.0
    %288 = vmatpush1.msra.mxu0 %v275
    %289 = vmatprep.subr.mxu0 0.0
    %290 = vmatpush1.msra.mxu0 %v274
    %291 = vmatprep.subr.mxu0 0.0
    %292 = vmatpush1.msra.mxu0 %v273
    %293 = vmatprep.subr.mxu0 0.0
    %294 = vmatpush1.msra.mxu0 %v272
    %295 = vmatprep.subr.mxu0 0.0
    %296 = vmatpush1.msra.mxu0 %v271
    %297 = vmatprep.subr.mxu0 0.0
    %298 = vmatpush1.msra.mxu0 %v270
    %299 = vmatprep.subr.mxu0 0.0
    %300 = vmatpush1.msra.mxu0 %v269
    %301 = vmatprep.subr.mxu0 0.0
    %302 = vmatpush1.msra.mxu0 %v268
    %303 = vmatprep.subr.mxu0 0.0
    %304 = vmatpush1.msra.mxu0 %v267
    %305 = vmatprep.subr.mxu0 0.0
    %306 = vmatpush1.msra.mxu0 %v266
    %307 = vmatprep.subr.mxu0 0.0
    %308 = vmatpush1.msra.mxu0 %v265
    %309 = vmatprep.subr.mxu0 0.0
    %310 = vmatpush1.msra.mxu0 %v264
    %311 = vmatprep.subr.mxu0 0.0
    %312 = vmatpush1.msra.mxu0 %v263
    %313 = vmatprep.subr.mxu0 0.0
    %314 = vmatpush1.msra.mxu0 %v262
    %315 = vmatprep.subr.mxu0 0.0
    %316 = vmatpush2.msra.mxu0 0.0
    %317 = vmatprep.subr.mxu0 0.0
    %318 = vmatpush2.msra.mxu0 0.0
    %319 = vmatprep.subr.mxu0 0.0
    %320 = vmatpush2.msra.mxu0 0.0
    %321 = vmatprep.subr.mxu0 0.0
    %322 = vmatpush2.msra.mxu0 0.0
    %323 = vmatprep.subr.mxu0 0.0
    %324 = vmatpush2.msra.mxu0 0.0
    %325 = vmatprep.subr.mxu0 0.0
    %326 = vmatpush2.msra.mxu0 0.0
    %327 = vmatprep.subr.mxu0 0.0
    %328 = vmatpush2.msra.mxu0 0.0
    %329 = vmatprep.subr.mxu0 0.0
    %330 = vmatpush2.msra.mxu0 0.0
    %331 = vmatprep.subr.mxu0 0.0
    %332 = vmatpush2.msra.mxu0 0.0
    %333 = vmatprep.subr.mxu0 0.0
    %334 = vmatpush2.msra.mxu0 0.0
    %335 = vmatprep.subr.mxu0 0.0
    %336 = vmatpush2.msra.mxu0 0.0
    %337 = vmatprep.subr.mxu0 0.0
    %338 = vmatpush2.msra.mxu0 0.0
    %339 = vmatprep.subr.mxu0 0.0
    %340 = vmatpush2.msra.mxu0 0.0
    %341 = vmatprep.subr.mxu0 0.0
    %342 = vmatpush2.msra.mxu0 0.0
    %343 = vmatprep.subr.mxu0 0.0
    %344 = vmatpush2.msra.mxu0 0.0
    %345 = vmatprep.subr.mxu0 0.0
    %346 = vmatpush2.msra.mxu0 0.0
    %347 = vmatprep.mubr.f32.mxu0 0.0
    %348 = vmatmul.mubr.f32.gmra.mxu0 %v261
    %v349 = vpop.f32.mrf.mxu0
    %v350 = vadd.f32 %v282, %v349
    %v351 = vpop.f32.mrf.mxu0
    %352 = vdwg.mxu0
    %353 = vst [vmem:[#allocation11] sm:$0xff] %v350
    // Predicated region
    $region42: #{tpu_custom_call.1} parent=1 // pred_check
      _
    $region43: #{tpu_custom_call.1} parent=1 // pred_check_branch
      %355 = sbr.rel (0) target = $region45
    $region44: #{tpu_custom_call.1} parent=1 // pred_region
      %s357 = ssub.s32 128, 128
      %358 = vsyncadd [#allocation4], %s357
      %s360 = sshll.u32 [#allocation11], 4
      %s361 = int_to_ptr.vmem [resolvable:$true] %s360
      %363 = dma.vmem_to_hbm [thread:$0]  %s361, 128, %s5, [#allocation4]
    $region45: #{tpu_custom_call.1} parent=1 // pred_fallthru
      _
    // Predicated region
    $region46: #{tpu_custom_call.1} parent=1 // pred_check
      _
    $region47: #{tpu_custom_call.1} parent=1 // pred_check_branch
      %365 = sbr.rel (0) target = $region49
    $region48: #{tpu_custom_call.1} parent=1 // pred_region
      %366 = dma.done [#allocation4], 128
    $region49: #{tpu_custom_call.1} parent=1 // pred_fallthru
      _
    %367 = vsyncpa [#allocation3], 1
    %368 = vsyncpa [#allocation6], 1
    %369 = vsyncpa [#allocation9], 1
    %370 = vsyncpa [#allocation4], 1

</llo_original>
